<compile_context>
chip_gen: v7x
topology: tpu7x:2x2x1
jax: 0.10.0
libtpu: 0.0.40
codegen_flags: <defaults>
</compile_context>

<pallas_src>
import functools

import jax
import jax.numpy as jnp
from jax.experimental import pallas as pl
from jax.experimental.pallas import tpu as pltpu


def _round_up(a: int, b: int) -> int:
    return (a + b - 1) // b * b


@functools.lru_cache(maxsize=None)
def _vmem_cap_bytes() -> int:
    # Chip-aware scoped-VMEM cap: ~80% of physical per-TensorCore VMEM
    # (v7x: 64 MiB -> ~51 MiB; v5e/v6e: 128 MiB -> ~102 MiB).
    try:
        phys = int(pltpu.get_tpu_info().vmem_capacity_bytes)
    except Exception:  # conservative fallback (assume v7x-sized VMEM)
        phys = 64 << 20
    return int(phys * 0.8)


def _ffn_kernel(x_ref, w1_ref, b1_ref, w2_ref, b2_ref, o_ref, acc_ref):
    # Grid: (i over row tiles [parallel], j over hidden chunks [arbitrary]).
    #   x_ref  : (tm, D)  row tile, constant across j (fetched once per i)
    #   w1_ref : (D, th)  streamed chunk of the first weight
    #   b1_ref : (1, th)  streamed chunk of the first bias
    #   w2_ref : (th, D)  streamed chunk of the second weight
    #   b2_ref : (1, D)
    #   o_ref  : (tm, D)  resident across j, written on the last hidden chunk
    #   acc_ref: (tm, D)  f32 scratch accumulator
    j = pl.program_id(1)

    @pl.when(j == 0)
    def _():
        acc_ref[...] = jnp.zeros_like(acc_ref)

    # Linear 1 chunk: native-dtype operands on the MXU, f32 accumulation.
    h = jnp.dot(x_ref[...], w1_ref[...], preferred_element_type=jnp.float32)
    h = h + b1_ref[...].astype(jnp.float32)

    # Swish (SiLU): the transcendental lands on the EUP, multiply on the VPU.
    h = h * jax.nn.sigmoid(h)

    # TODO(synk): nn.Dropout is identity in eval mode; no in-kernel RNG applied.

    # Linear 2 chunk: cast the activation back to the weight dtype so the MXU
    # stays on the fast (e.g. bf16) path; accumulate into the f32 scratch.
    acc_ref[...] += jnp.dot(h.astype(w2_ref.dtype), w2_ref[...],
                            preferred_element_type=jnp.float32)

    @pl.when(j == pl.num_programs(1) - 1)
    def _():
        y = acc_ref[...] + b2_ref[...].astype(jnp.float32)
        o_ref[...] = y.astype(o_ref.dtype)


def prepare_ffn_params(w1, b1, w2, b2):
    """Zero-pad the hidden dim to a multiple of 128 — once, outside the hot path.

    Zero padding keeps the math exact: padded hidden units get zero
    pre-activation (Swish(0)=0) and hit zero rows of W2.
    Weights are stored (in, out), i.e. transposed relative to torch Linear.
    """
    _, h = w1.shape
    hp = _round_up(h, 128)
    if hp != h:
        w1 = jnp.pad(w1, ((0, 0), (0, hp - h)))
        b1 = jnp.pad(b1, ((0, 0), (0, hp - h)))
        w2 = jnp.pad(w2, ((0, hp - h), (0, 0)))
    return w1, b1, w2, b2


def _pick_tiles(m: int, h: int, tm: int):
    # Row tile: MXU-sized, but guarantee >=2 grid steps along M when there is
    # enough work so both v7x TensorCores get a share (megacore).
    if m <= tm:
        tm_eff = _round_up(pl.cdiv(m, 2), 128) if m >= 256 else m
    else:
        tm_eff = tm
    # Hidden chunk: largest multiple of 128 dividing H, capped at 512, so the
    # (tm, th) f32 intermediate stays bounded (no giant vreg spills).
    th = 128
    for cand in (512, 384, 256, 128):
        if h % cand == 0:
            th = cand
            break
    return tm_eff, th


@functools.partial(jax.jit, static_argnames=("tm",))
def feed_forward_module(x, w1, b1, w2, b2, *, tm=512):
    """x: (batch, time, dim) -> (batch, time, dim).

    Pass weights through prepare_ffn_params() once (hidden dim padded to a
    multiple of 128).  For best MXU throughput pass bf16 x / weights.
    """
    B, T, D = x.shape
    Dw, H = w1.shape
    if Dw != D:
        raise ValueError("w1 must be stored (in, out) with in == encoder_dim")
    if H % 128 != 0:
        raise ValueError("hidden dim must be padded via prepare_ffn_params()")
    M = B * T

    tm_eff, th = _pick_tiles(M, H, tm)
    grid_m = pl.cdiv(M, tm_eff)   # ragged tail handled by Pallas masking
    grid_h = H // th

    x2d = x.reshape(M, D)

    # VMEM budget: double-buffered x/out tiles and weight chunks + f32
    # accumulator + bounded (tm, th) intermediate, with headroom; chip-capped.
    bx = x.dtype.itemsize
    bw = w1.dtype.itemsize
    io_bytes = 2 * 2 * tm_eff * D * bx
    w_bytes = 2 * (D * th + th * D) * bw + 2 * (th + D) * b1.dtype.itemsize
    acc_bytes = tm_eff * D * 4
    h_bytes = 2 * tm_eff * th * 4
    vmem_limit = int(1.5 * (io_bytes + w_bytes + acc_bytes + h_bytes)) + (4 << 20)
    vmem_limit = min(max(vmem_limit, 32 << 20), _vmem_cap_bytes())

    cost = pl.CostEstimate(
        flops=4 * M * D * H,                      # two matmuls, 2 flops/MAC
        transcendentals=M * H,                    # sigmoid exp
        bytes_accessed=(2 * M * D * bx            # x in + out
                        + 2 * D * H * bw          # W1 + W2
                        + (H + D) * b1.dtype.itemsize),
    )

    out2d = pl.pallas_call(
        _ffn_kernel,
        out_shape=jax.ShapeDtypeStruct((M, D), x.dtype),
        grid_spec=pltpu.PrefetchScalarGridSpec(
            num_scalar_prefetch=0,
            grid=(grid_m, grid_h),
            in_specs=[
                pl.BlockSpec((tm_eff, D), lambda i, j: (i, 0)),  # x row tile
                pl.BlockSpec((D, th), lambda i, j: (0, j)),      # W1 chunk
                pl.BlockSpec((1, th), lambda i, j: (0, j)),      # b1 chunk
                pl.BlockSpec((th, D), lambda i, j: (j, 0)),      # W2 chunk
                pl.BlockSpec((1, D), lambda i, j: (0, 0)),       # b2
            ],
            out_specs=pl.BlockSpec((tm_eff, D), lambda i, j: (i, 0)),
            scratch_shapes=[pltpu.VMEM((tm_eff, D), jnp.float32)],
        ),
        compiler_params=pltpu.CompilerParams(
            dimension_semantics=("parallel", "arbitrary"),
            vmem_limit_bytes=vmem_limit,
        ),
        cost_estimate=cost,
    )(x2d, w1, b1, w2, b2)

    return out2d.reshape(B, T, D)


def _reference(x, w1, b1, w2, b2):
    h = jnp.einsum("btd,dh->bth", x.astype(jnp.float32),
                   w1.astype(jnp.float32)) + b1[0].astype(jnp.float32)
    h = h * jax.nn.sigmoid(h)
    y = jnp.einsum("bth,hd->btd", h, w2.astype(jnp.float32)) \
        + b2[0].astype(jnp.float32)
    return y


def _make_params(key, d, h, dtype):
    k1, k2, k3, k4 = jax.random.split(key, 4)
    s1 = 1.0 / (d ** 0.5)
    s2 = 1.0 / (h ** 0.5)
    w1 = jax.random.uniform(k1, (d, h), jnp.float32, -s1, s1).astype(dtype)
    b1 = jax.random.uniform(k2, (1, h), jnp.float32, -s1, s1).astype(dtype)
    w2 = jax.random.uniform(k3, (h, d), jnp.float32, -s2, s2).astype(dtype)
    b2 = jax.random.uniform(k4, (1, d), jnp.float32, -s2, s2).astype(dtype)
    return w1, b1, w2, b2


if __name__ == "__main__":
    key = jax.random.PRNGKey(0)
    kx1, kp1, kx2, kp2 = jax.random.split(key, 4)

    # --- Test 1: f32, small module-faithful shapes (dim=64, expansion=4). ---
    batch, time, dim, expansion = 2, 16, 64, 4
    hidden = dim * expansion
    x = jax.random.normal(kx1, (batch, time, dim), jnp.float32)
    w1, b1, w2, b2 = _make_params(kp1, dim, hidden, jnp.float32)
    w1p, b1p, w2p, b2p = prepare_ffn_params(w1, b1, w2, b2)

    out = jax.block_until_ready(feed_forward_module(x, w1p, b1p, w2p, b2p))
    ref = _reference(x, w1, b1, w2, b2).astype(x.dtype)
    assert out.shape == (batch, time, dim)
    assert jnp.allclose(out, ref, atol=1e-4, rtol=1e-4), \
        float(jnp.max(jnp.abs(out - ref)))

    # --- Test 2: bf16 fast path + H padding + ragged M + multi-chunk H. ---
    batch2, time2, dim2, expansion2 = 3, 200, 96, 7
    hidden2 = dim2 * expansion2  # 672 -> padded to 768 (two 384-chunks)
    x2 = jax.random.normal(kx2, (batch2, time2, dim2), jnp.float32)
    w1f, b1f, w2f, b2f = _make_params(kp2, dim2, hidden2, jnp.float32)
    xb = x2.astype(jnp.bfloat16)
    w1b, b1b, w2b, b2b = (a.astype(jnp.bfloat16) for a in (w1f, b1f, w2f, b2f))
    w1bp, b1bp, w2bp, b2bp = prepare_ffn_params(w1b, b1b, w2b, b2b)

    out2 = jax.block_until_ready(feed_forward_module(xb, w1bp, b1bp, w2bp, b2bp))
    ref2 = _reference(xb, w1b, b1b, w2b, b2b)
    assert out2.shape == (batch2, time2, dim2)
    assert jnp.allclose(out2.astype(jnp.float32), ref2, atol=5e-2, rtol=5e-2), \
        float(jnp.max(jnp.abs(out2.astype(jnp.float32) - ref2)))

    print("KERNEL_OK")
</pallas_src>

<mosaic_0001>
module attributes {stable_mosaic.version = 11 : i64} {
  func.func @_ffn_kernel(%arg0: i32, %arg1: i32, %arg2: memref<32x64xf32, #tpu.memory_space<vmem>>, %arg3: memref<64x256xf32, #tpu.memory_space<vmem>>, %arg4: memref<1x256xf32, #tpu.memory_space<vmem>>, %arg5: memref<256x64xf32, #tpu.memory_space<vmem>>, %arg6: memref<1x64xf32, #tpu.memory_space<vmem>>, %arg7: memref<32x64xf32, #tpu.memory_space<vmem>>, %arg8: memref<32x64xf32, #tpu.memory_space<vmem>>) attributes {dimension_semantics = [#tpu.dimension_semantics<parallel>, #tpu.dimension_semantics<arbitrary>], iteration_bounds = array<i64: 1, 1>, scalar_prefetch = 0 : i64, scratch_operands = 1 : i64, tpu.core_type = #tpu.core_type<tc>, window_params = [{transform_indices = @transform_0, window_bounds = array<i64: 32, 64>}, {transform_indices = @transform_1, window_bounds = array<i64: 64, 256>}, {transform_indices = @transform_2, window_bounds = array<i64: 1, 256>}, {transform_indices = @transform_3, window_bounds = array<i64: 256, 64>}, {pipeline_mode = #tpu.pipeline_mode<synchronous>, transform_indices = @transform_4, window_bounds = array<i64: 1, 64>}, {transform_indices = @transform_5, window_bounds = array<i64: 32, 64>}]} {
    %c0_i32 = arith.constant 0 : i32
    %0 = arith.cmpi eq, %arg1, %c0_i32 : i32
    %1 = arith.extui %0 : i1 to i32
    %c0_i32_0 = arith.constant 0 : i32
    %2 = arith.cmpi ne, %1, %c0_i32_0 : i32
    scf.if %2 {
      %cst_16 = arith.constant 0.000000e+00 : f32
      %23 = vector.broadcast %cst_16 : f32 to vector<32x64xf32>
      %c0_17 = arith.constant 0 : index
      %c0_18 = arith.constant 0 : index
      %24 = vector.load %arg8[%c0_17, %c0_18] : memref<32x64xf32, #tpu.memory_space<vmem>>, vector<32x64xf32>
      tpu.vector_store %arg8[%c0_17, %c0_18], %23 {strides = array<i32>} : memref<32x64xf32, #tpu.memory_space<vmem>>, vector<32x64xf32>,
    } else {
    }
    %c0 = arith.constant 0 : index
    %c0_1 = arith.constant 0 : index
    %3 = vector.load %arg2[%c0, %c0_1] : memref<32x64xf32, #tpu.memory_space<vmem>>, vector<32x64xf32>
    %c0_2 = arith.constant 0 : index
    %c0_3 = arith.constant 0 : index
    %4 = vector.load %arg3[%c0_2, %c0_3] : memref<64x256xf32, #tpu.memory_space<vmem>>, vector<64x256xf32>
    %cst = arith.constant dense<0.000000e+00> : vector<32x256xf32>
    %5 = tpu.matmul %3, %4, %cst {dimension_numbers = #tpu.dot_dimension_numbers<[1], [0], [0], [1], [0, 0, 1, 1], [], []>} : vector<32x64xf32>, vector<64x256xf32>, vector<32x256xf32> -> vector<32x256xf32>
    %c0_4 = arith.constant 0 : index
    %c0_5 = arith.constant 0 : index
    %6 = vector.load %arg4[%c0_4, %c0_5] : memref<1x256xf32, #tpu.memory_space<vmem>>, vector<1x256xf32>
    %7 = vector.broadcast %6 : vector<1x256xf32> to vector<32x256xf32>
    %8 = arith.addf %5, %7 : vector<32x256xf32>
    %9 = arith.negf %8 : vector<32x256xf32>
    %10 = math.exp %9 : vector<32x256xf32>
    %cst_6 = arith.constant 1.000000e+00 : f32
    %11 = vector.broadcast %cst_6 : f32 to vector<32x256xf32>
    %12 = arith.addf %11, %10 : vector<32x256xf32>
    %13 = arith.divf %11, %12 : vector<32x256xf32>
    %14 = arith.mulf %8, %13 : vector<32x256xf32>
    %c0_7 = arith.constant 0 : index
    %c0_8 = arith.constant 0 : index
    %15 = vector.load %arg8[%c0_7, %c0_8] : memref<32x64xf32, #tpu.memory_space<vmem>>, vector<32x64xf32>
    %c0_9 = arith.constant 0 : index
    %c0_10 = arith.constant 0 : index
    %16 = vector.load %arg5[%c0_9, %c0_10] : memref<256x64xf32, #tpu.memory_space<vmem>>, vector<256x64xf32>
    %cst_11 = arith.constant dense<0.000000e+00> : vector<32x64xf32>
    %17 = tpu.matmul %14, %16, %cst_11 {dimension_numbers = #tpu.dot_dimension_numbers<[1], [0], [0], [1], [0, 0, 1, 1], [], []>} : vector<32x256xf32>, vector<256x64xf32>, vector<32x64xf32> -> vector<32x64xf32>
    %18 = arith.addf %15, %17 : vector<32x64xf32>
    %c0_12 = arith.constant 0 : index
    %c0_13 = arith.constant 0 : index
    %19 = vector.load %arg8[%c0_12, %c0_13] : memref<32x64xf32, #tpu.memory_space<vmem>>, vector<32x64xf32>
    tpu.vector_store %arg8[%c0_12, %c0_13], %18 {strides = array<i32>} : memref<32x64xf32, #tpu.memory_space<vmem>>, vector<32x64xf32>,
    %c0_i32_14 = arith.constant 0 : i32
    %20 = arith.cmpi eq, %arg1, %c0_i32_14 : i32
    %21 = arith.extui %20 : i1 to i32
    %c0_i32_15 = arith.constant 0 : i32
    %22 = arith.cmpi ne, %21, %c0_i32_15 : i32
    scf.if %22 {
      %c0_16 = arith.constant 0 : index
      %c0_17 = arith.constant 0 : index
      %23 = vector.load %arg8[%c0_16, %c0_17] : memref<32x64xf32, #tpu.memory_space<vmem>>, vector<32x64xf32>
      %c0_18 = arith.constant 0 : index
      %c0_19 = arith.constant 0 : index
      %24 = vector.load %arg6[%c0_18, %c0_19] : memref<1x64xf32, #tpu.memory_space<vmem>>, vector<1x64xf32>
      %25 = vector.broadcast %24 : vector<1x64xf32> to vector<32x64xf32>
      %26 = arith.addf %23, %25 : vector<32x64xf32>
      %c0_20 = arith.constant 0 : index
      %c0_21 = arith.constant 0 : index
      %27 = vector.load %arg7[%c0_20, %c0_21] : memref<32x64xf32, #tpu.memory_space<vmem>>, vector<32x64xf32>
      tpu.vector_store %arg7[%c0_20, %c0_21], %26 {strides = array<i32>} : memref<32x64xf32, #tpu.memory_space<vmem>>, vector<32x64xf32>,
    } else {
    }
    return
  }
  func.func @transform_0(%arg0: i32, %arg1: i32) -> (i32, i32) {
    %c0_i32 = arith.constant 0 : i32
    %c0_i32_0 = arith.constant 0 : i32
    return %arg0, %c0_i32 : i32, i32
  }
  func.func @transform_1(%arg0: i32, %arg1: i32) -> (i32, i32) {
    %c0_i32 = arith.constant 0 : i32
    %c0_i32_0 = arith.constant 0 : i32
    return %c0_i32, %arg1 : i32, i32
  }
  func.func @transform_2(%arg0: i32, %arg1: i32) -> (i32, i32) {
    %c0_i32 = arith.constant 0 : i32
    %c0_i32_0 = arith.constant 0 : i32
    return %c0_i32, %arg1 : i32, i32
  }
  func.func @transform_3(%arg0: i32, %arg1: i32) -> (i32, i32) {
    %c0_i32 = arith.constant 0 : i32
    %c0_i32_0 = arith.constant 0 : i32
    return %arg1, %c0_i32 : i32, i32
  }
  func.func @transform_4(%arg0: i32, %arg1: i32) -> (i32, i32) {
    %c0_i32 = arith.constant 0 : i32
    %c0_i32_0 = arith.constant 0 : i32
    %c0_i32_1 = arith.constant 0 : i32
    return %c0_i32, %c0_i32_0 : i32, i32
  }
  func.func @transform_5(%arg0: i32, %arg1: i32) -> (i32, i32) {
    %c0_i32 = arith.constant 0 : i32
    %c0_i32_0 = arith.constant 0 : i32
    return %arg0, %c0_i32 : i32, i32
  }
}

</mosaic_0001>

<llo_original>
// kernel: feed_forward_module.1
$region0: #{feed_forward_module.1}
  #allocation0 [shape = 'u32[]', space=smem, size = 0x4, offset = 0x4, fixed_abs, tag = 'smem constant byte address 0x4 - core index']
  #allocation1 [shape = 'u32[144,128]{1,0:T(1,128)}', space=vmem, size = 0x12000, scoped, tag = 'internal scratch']
  #allocation2 [shape = 'f32[32,64]{1,0:T(8,128)}', space=vmem, size = 0x4000, scoped, tag = 'scratch operand']
  %s0 = inlined_call_operand.vmem [shape: f32[32,64], index: 0, kind: input, shape index: {}]
  %s1 = inlined_call_operand.vmem [shape: f32[64,256], index: 1, kind: input, shape index: {}]
  %s2 = inlined_call_operand.vmem [shape: f32[1,256], index: 2, kind: input, shape index: {}]
  %s3 = inlined_call_operand.vmem [shape: f32[256,64], index: 3, kind: input, shape index: {}]
  %s4 = inlined_call_operand.vmem [shape: f32[1,64], index: 4, kind: input, shape index: {}]
  %s5 = inlined_call_operand.hbm [shape: f32[32,64], index: 5, kind: output, shape index: {}]
  %s6 = sld [smem:[#allocation0]]
  $region38: #{feed_forward_module.1} parent=0
    _
  %s8 = ssub.s32 1, %s6
  %s9 = scalar_select 0, %s8, %s6
  $region1: #{feed_forward_module.1} parent=0
    #allocation3 [shape = 'u8[16384]{0}', space=vmem, size = 0x4000, scoped, tag = 'output window, operand 0, single buffered']
    #allocation4 [shape = 's32[1]{0}', space=sflag, size = 0x4, scoped, tag = 'scoped memory for feed_forward_module.1']
    %10 = vsyncpa [#allocation4], 0
    // Predicated region
    $region2: #{feed_forward_module.1} parent=1 // pred_check
      _
    $region3: #{feed_forward_module.1} parent=1 // pred_check_branch
      %12 = sbr.rel (0) target = $region5
    $region4: #{feed_forward_module.1} parent=1 // pred_region
      _
    $region5: #{feed_forward_module.1} parent=1 // pred_fallthru
      _
    // Predicated region
    $region6: #{feed_forward_module.1} parent=1 // pred_check
      _
    $region7: #{feed_forward_module.1} parent=1 // pred_check_branch
      %14 = sbr.rel (0) target = $region9
    $region8: #{feed_forward_module.1} parent=1 // pred_region
      _
    $region9: #{feed_forward_module.1} parent=1 // pred_fallthru
      _
    // Predicated region
    $region10: #{feed_forward_module.1} parent=1 // pred_check
      _
    $region11: #{feed_forward_module.1} parent=1 // pred_check_branch
      %16 = sbr.rel (0) target = $region13
    $region12: #{feed_forward_module.1} parent=1 // pred_region
      _
    $region13: #{feed_forward_module.1} parent=1 // pred_fallthru
      _
    // Predicated region
    $region14: #{feed_forward_module.1} parent=1 // pred_check
      _
    $region15: #{feed_forward_module.1} parent=1 // pred_check_branch
      %18 = sbr.rel (0) target = $region17
    $region16: #{feed_forward_module.1} parent=1 // pred_region
      _
    $region17: #{feed_forward_module.1} parent=1 // pred_fallthru
      _
    // Predicated region
    $region18: #{feed_forward_module.1} parent=1 // pred_check
      _
    $region19: #{feed_forward_module.1} parent=1 // pred_check_branch
      %20 = sbr.rel (0) target = $region21
    $region20: #{feed_forward_module.1} parent=1 // pred_region
      _
    $region21: #{feed_forward_module.1} parent=1 // pred_fallthru
      _
    %p21 = scmp.eq.s32.totalorder 0, 0
    // Predicated region
    $region22: #{feed_forward_module.1} parent=1 // pred_check
      %p22 = pneg %p21
    $region23: #{feed_forward_module.1} parent=1 // pred_check_branch
      %24 = sbr.rel (%p22) target = $region25
    $region24: #{feed_forward_module.1} parent=1 // pred_region
      %vm25 = vcmask 523264
      %26 = vst.msk [vmem:[#allocation2] sm:$0xff] %vm25, 0.0
      %27 = vst.msk [vmem:[#allocation2 + $0x8] sm:$0xff] %vm25, 0.0
      %28 = vst.msk [vmem:[#allocation2 + $0x10] sm:$0xff] %vm25, 0.0
      %29 = vst.msk [vmem:[#allocation2 + $0x18] sm:$0xff] %vm25, 0.0
    $region25: #{feed_forward_module.1} parent=1 // pred_fallthru
      _
    %v30 = vld [vmem:[%s0] sm:$0xff]
    %v31 = vld [vmem:[%s0 + $0x8] sm:$0xff]
    %v32 = vld [vmem:[%s0 + $0x10] sm:$0xff]
    %v33 = vld [vmem:[%s0 + $0x18] sm:$0xff]
    %v34 = vld [vmem:[%s1] sm:$0xff]
    %v35 = vld [vmem:[%s1 + $0x8] sm:$0xff]
    %v36 = vld [vmem:[%s1 + $0x10] sm:$0xff]
    %v37 = vld [vmem:[%s1 + $0x18] sm:$0xff]
    %v38 = vld [vmem:[%s1 + $0x20] sm:$0xff]
    %v39 = vld [vmem:[%s1 + $0x28] sm:$0xff]
    %v40 = vld [vmem:[%s1 + $0x30] sm:$0xff]
    %v41 = vld [vmem:[%s1 + $0x38] sm:$0xff]
    %v42 = vld [vmem:[%s1 + $0x40] sm:$0xff]
    %v43 = vld [vmem:[%s1 + $0x48] sm:$0xff]
    %v44 = vld [vmem:[%s1 + $0x50] sm:$0xff]
    %v45 = vld [vmem:[%s1 + $0x58] sm:$0xff]
    %v46 = vld [vmem:[%s1 + $0x60] sm:$0xff]
    %v47 = vld [vmem:[%s1 + $0x68] sm:$0xff]
    %v48 = vld [vmem:[%s1 + $0x70] sm:$0xff]
    %v49 = vld [vmem:[%s1 + $0x78] sm:$0xff]
    %v50 = vld [vmem:[%s2] sm:$0x3]
    %v52 = vlaneseq
    %v53 = vshrl.u32 %v52, 7
    %v54 = vsub.s32 0, %v53
    %v55 = vrot.slane %v50, %v54
    %v56 = vlaneseq
    %v57 = vshrl.u32 %v56, 7
    %v58 = vsub.s32 1, %v57
    %v59 = vrot.slane %v50, %v58
    %vm62 = vcmask 523264
    %v64 = vsel %vm62, %v30, 0
    %v67 = vsel %vm62, %v31, 0
    %v70 = vsel %vm62, %v32, 0
    %v73 = vsel %vm62, %v33, 0
    %75 = vmatprep.subr.mxu0 %v35
    %76 = vmatpush1.msra.mxu0 %v34
    %77 = vmatprep.subr.mxu0 %v37
    %78 = vmatpush1.msra.mxu0 %v36
    %79 = vmatprep.subr.mxu0 %v39
    %80 = vmatpush1.msra.mxu0 %v38
    %81 = vmatprep.subr.mxu0 %v41
    %82 = vmatpush1.msra.mxu0 %v40
    %83 = vmatprep.subr.mxu0 %v43
    %84 = vmatpush1.msra.mxu0 %v42
    %85 = vmatprep.subr.mxu0 %v45
    %86 = vmatpush1.msra.mxu0 %v44
    %87 = vmatprep.subr.mxu0 %v47
    %88 = vmatpush1.msra.mxu0 %v46
    %89 = vmatprep.subr.mxu0 %v49
    %90 = vmatpush1.msra.mxu0 %v48
    %91 = vmatprep.subr.mxu0 0.0
    %92 = vmatpush1.msra.mxu0 0.0
    %93 = vmatprep.subr.mxu0 0.0
    %94 = vmatpush1.msra.mxu0 0.0
    %95 = vmatprep.subr.mxu0 0.0
    %96 = vmatpush1.msra.mxu0 0.0
    %97 = vmatprep.subr.mxu0 0.0
    %98 = vmatpush1.msra.mxu0 0.0
    %99 = vmatprep.subr.mxu0 0.0
    %100 = vmatpush1.msra.mxu0 0.0
    %101 = vmatprep.subr.mxu0 0.0
    %102 = vmatpush1.msra.mxu0 0.0
    %103 = vmatprep.subr.mxu0 0.0
    %104 = vmatpush1.msra.mxu0 0.0
    %105 = vmatprep.subr.mxu0 0.0
    %106 = vmatpush1.msra.mxu0 0.0
    %107 = vmatprep.subr.mxu0 0.0
    %108 = vmatpush1.msra.mxu0 0.0
    %109 = vmatprep.subr.mxu0 0.0
    %110 = vmatpush1.msra.mxu0 0.0
    %111 = vmatprep.subr.mxu0 0.0
    %112 = vmatpush1.msra.mxu0 0.0
    %113 = vmatprep.subr.mxu0 0.0
    %114 = vmatpush1.msra.mxu0 0.0
    %115 = vmatprep.subr.mxu0 0.0
    %116 = vmatpush1.msra.mxu0 0.0
    %117 = vmatprep.subr.mxu0 0.0
    %118 = vmatpush1.msra.mxu0 0.0
    %119 = vmatprep.subr.mxu0 0.0
    %120 = vmatpush1.msra.mxu0 0.0
    %121 = vmatprep.subr.mxu0 0.0
    %122 = vmatpush1.msra.mxu0 0.0
    %123 = vmatprep.subr.mxu0 0.0
    %124 = vmatpush1.msra.mxu0 0.0
    %125 = vmatprep.subr.mxu0 0.0
    %126 = vmatpush1.msra.mxu0 0.0
    %127 = vmatprep.subr.mxu0 0.0
    %128 = vmatpush1.msra.mxu0 0.0
    %129 = vmatprep.subr.mxu0 0.0
    %130 = vmatpush1.msra.mxu0 0.0
    %131 = vmatprep.subr.mxu0 0.0
    %132 = vmatpush1.msra.mxu0 0.0
    %133 = vmatprep.subr.mxu0 0.0
    %134 = vmatpush1.msra.mxu0 0.0
    %135 = vmatprep.subr.mxu0 0.0
    %136 = vmatpush1.msra.mxu0 0.0
    %137 = vmatprep.subr.mxu0 0.0
    %138 = vmatpush1.msra.mxu0 0.0
    %139 = vmatprep.mubr.f32.mxu0 0.0
    %140 = vmatmul.mubr.f32.gmra.mrb[0].mxu0 %v64
    %v141 = vpop.f32.mrb[0].mxu0
    %v142 = vadd.f32 %v55, %v141
    %v143 = vpop.f32.mrb[0].mxu0
    %v144 = vadd.f32 %v59, %v143
    %145 = vmatprep.mubr.f32.mxu0 0.0
    %146 = vmatmul.mubr.f32.gmra.mrb[0].mxu0 %v67
    %v147 = vpop.f32.mrb[0].mxu0
    %v148 = vadd.f32 %v55, %v147
    %v149 = vpop.f32.mrb[0].mxu0
    %v150 = vadd.f32 %v59, %v149
    %151 = vmatprep.mubr.f32.mxu0 0.0
    %152 = vmatmul.mubr.f32.gmra.mrb[0].mxu0 %v70
    %v153 = vpop.f32.mrb[0].mxu0
    %v154 = vadd.f32 %v55, %v153
    %v155 = vpop.f32.mrb[0].mxu0
    %v156 = vadd.f32 %v59, %v155
    %157 = vmatprep.mubr.f32.mxu0 0.0
    %158 = vmatmul.mubr.f32.gmra.mrb[0].mxu0 %v73
    %v159 = vpop.f32.mrb[0].mxu0
    %v160 = vadd.f32 %v55, %v159
    %v161 = vpop.f32.mrb[0].mxu0
    %v162 = vadd.f32 %v59, %v161
    %163 = vdwg.mxu0
    %v164 = vxor.u32 %v142, 2147483648
    %v165 = vxor.u32 %v144, 2147483648
    %v166 = vxor.u32 %v148, 2147483648
    %v167 = vxor.u32 %v150, 2147483648
    %v168 = vxor.u32 %v154, 2147483648
    %v169 = vxor.u32 %v156, 2147483648
    %v170 = vxor.u32 %v160, 2147483648
    %v171 = vxor.u32 %v162, 2147483648
    %v172 = vmul.f32 %v164, 1.442695
    %v173 = vpow.pop %v172
    %v174 = vmul.f32 %v165, 1.442695
    %v175 = vpow.pop %v174
    %v176 = vmul.f32 %v166, 1.442695
    %v177 = vpow.pop %v176
    %v178 = vmul.f32 %v167, 1.442695
    %v179 = vpow.pop %v178
    %v180 = vmul.f32 %v168, 1.442695
    %v181 = vpow.pop %v180
    %v182 = vmul.f32 %v169, 1.442695
    %v183 = vpow.pop %v182
    %v184 = vmul.f32 %v170, 1.442695
    %v185 = vpow.pop %v184
    %v186 = vmul.f32 %v171, 1.442695
    %v187 = vpow.pop %v186
    %v188 = vadd.f32 %v173, 1.0
    %v189 = vadd.f32 %v175, 1.0
    %v190 = vadd.f32 %v177, 1.0
    %v191 = vadd.f32 %v179, 1.0
    %v192 = vadd.f32 %v181, 1.0
    %v193 = vadd.f32 %v183, 1.0
    %v194 = vadd.f32 %v185, 1.0
    %v195 = vadd.f32 %v187, 1.0
    %v196 = vrcp.pop %v188
    %v197 = vmul.f32 1.0, %v196
    %v198 = vrcp.pop %v189
    %v199 = vmul.f32 1.0, %v198
    %v200 = vrcp.pop %v190
    %v201 = vmul.f32 1.0, %v200
    %v202 = vrcp.pop %v191
    %v203 = vmul.f32 1.0, %v202
    %v204 = vrcp.pop %v192
    %v205 = vmul.f32 1.0, %v204
    %v206 = vrcp.pop %v193
    %v207 = vmul.f32 1.0, %v206
    %v208 = vrcp.pop %v194
    %v209 = vmul.f32 1.0, %v208
    %v210 = vrcp.pop %v195
    %v211 = vmul.f32 1.0, %v210
    %v212 = vmul.f32 %v142, %v197
    %v213 = vmul.f32 %v144, %v199
    %v214 = vmul.f32 %v148, %v201
    %v215 = vmul.f32 %v150, %v203
    %v216 = vmul.f32 %v154, %v205
    %v217 = vmul.f32 %v156, %v207
    %v218 = vmul.f32 %v160, %v209
    %v219 = vmul.f32 %v162, %v211
    %v220 = vld [vmem:[#allocation2] sm:$0xff]
    %v221 = vld [vmem:[#allocation2 + $0x8] sm:$0xff]
    %v222 = vld [vmem:[#allocation2 + $0x10] sm:$0xff]
    %v223 = vld [vmem:[#allocation2 + $0x18] sm:$0xff]
    %v224 = vld [vmem:[%s3] sm:$0xff]
    %v225 = vld [vmem:[%s3 + $0x8] sm:$0xff]
    %v226 = vld [vmem:[%s3 + $0x10] sm:$0xff]
    %v227 = vld [vmem:[%s3 + $0x18] sm:$0xff]
    %v228 = vld [vmem:[%s3 + $0x20] sm:$0xff]
    %v229 = vld [vmem:[%s3 + $0x28] sm:$0xff]
    %v230 = vld [vmem:[%s3 + $0x30] sm:$0xff]
    %v231 = vld [vmem:[%s3 + $0x38] sm:$0xff]
    %v232 = vld [vmem:[%s3 + $0x40] sm:$0xff]
    %v233 = vld [vmem:[%s3 + $0x48] sm:$0xff]
    %v234 = vld [vmem:[%s3 + $0x50] sm:$0xff]
    %v235 = vld [vmem:[%s3 + $0x58] sm:$0xff]
    %v236 = vld [vmem:[%s3 + $0x60] sm:$0xff]
    %v237 = vld [vmem:[%s3 + $0x68] sm:$0xff]
    %v238 = vld [vmem:[%s3 + $0x70] sm:$0xff]
    %v239 = vld [vmem:[%s3 + $0x78] sm:$0xff]
    %v240 = vld [vmem:[%s3 + $0x80] sm:$0xff]
    %v241 = vld [vmem:[%s3 + $0x88] sm:$0xff]
    %v242 = vld [vmem:[%s3 + $0x90] sm:$0xff]
    %v243 = vld [vmem:[%s3 + $0x98] sm:$0xff]
    %v244 = vld [vmem:[%s3 + $0xa0] sm:$0xff]
    %v245 = vld [vmem:[%s3 + $0xa8] sm:$0xff]
    %v246 = vld [vmem:[%s3 + $0xb0] sm:$0xff]
    %v247 = vld [vmem:[%s3 + $0xb8] sm:$0xff]
    %v248 = vld [vmem:[%s3 + $0xc0] sm:$0xff]
    %v249 = vld [vmem:[%s3 + $0xc8] sm:$0xff]
    %v250 = vld [vmem:[%s3 + $0xd0] sm:$0xff]
    %v251 = vld [vmem:[%s3 + $0xd8] sm:$0xff]
    %v252 = vld [vmem:[%s3 + $0xe0] sm:$0xff]
    %v253 = vld [vmem:[%s3 + $0xe8] sm:$0xff]
    %v254 = vld [vmem:[%s3 + $0xf0] sm:$0xff]
    %v255 = vld [vmem:[%s3 + $0xf8] sm:$0xff]
    %256 = vmatprep.subr.mxu0 0.0
    %257 = vmatpush1.msra.mxu0 %v224
    %258 = vmatprep.subr.mxu0 0.0
    %259 = vmatpush1.msra.mxu0 %v225
    %260 = vmatprep.subr.mxu0 0.0
    %261 = vmatpush1.msra.mxu0 %v226
    %262 = vmatprep.subr.mxu0 0.0
    %263 = vmatpush1.msra.mxu0 %v227
    %264 = vmatprep.subr.mxu0 0.0
    %265 = vmatpush1.msra.mxu0 %v228
    %266 = vmatprep.subr.mxu0 0.0
    %267 = vmatpush1.msra.mxu0 %v229
    %268 = vmatprep.subr.mxu0 0.0
    %269 = vmatpush1.msra.mxu0 %v230
    %270 = vmatprep.subr.mxu0 0.0
    %271 = vmatpush1.msra.mxu0 %v231
    %272 = vmatprep.subr.mxu0 0.0
    %273 = vmatpush1.msra.mxu0 %v232
    %274 = vmatprep.subr.mxu0 0.0
    %275 = vmatpush1.msra.mxu0 %v233
    %276 = vmatprep.subr.mxu0 0.0
    %277 = vmatpush1.msra.mxu0 %v234
    %278 = vmatprep.subr.mxu0 0.0
    %279 = vmatpush1.msra.mxu0 %v235
    %280 = vmatprep.subr.mxu0 0.0
    %281 = vmatpush1.msra.mxu0 %v236
    %282 = vmatprep.subr.mxu0 0.0
    %283 = vmatpush1.msra.mxu0 %v237
    %284 = vmatprep.subr.mxu0 0.0
    %285 = vmatpush1.msra.mxu0 %v238
    %286 = vmatprep.subr.mxu0 0.0
    %287 = vmatpush1.msra.mxu0 %v239
    %288 = vmatprep.subr.mxu0 0.0
    %289 = vmatpush1.msra.mxu0 %v240
    %290 = vmatprep.subr.mxu0 0.0
    %291 = vmatpush1.msra.mxu0 %v241
    %292 = vmatprep.subr.mxu0 0.0
    %293 = vmatpush1.msra.mxu0 %v242
    %294 = vmatprep.subr.mxu0 0.0
    %295 = vmatpush1.msra.mxu0 %v243
    %296 = vmatprep.subr.mxu0 0.0
    %297 = vmatpush1.msra.mxu0 %v244
    %298 = vmatprep.subr.mxu0 0.0
    %299 = vmatpush1.msra.mxu0 %v245
    %300 = vmatprep.subr.mxu0 0.0
    %301 = vmatpush1.msra.mxu0 %v246
    %302 = vmatprep.subr.mxu0 0.0
    %303 = vmatpush1.msra.mxu0 %v247
    %304 = vmatprep.subr.mxu0 0.0
    %305 = vmatpush1.msra.mxu0 %v248
    %306 = vmatprep.subr.mxu0 0.0
    %307 = vmatpush1.msra.mxu0 %v249
    %308 = vmatprep.subr.mxu0 0.0
    %309 = vmatpush1.msra.mxu0 %v250
    %310 = vmatprep.subr.mxu0 0.0
    %311 = vmatpush1.msra.mxu0 %v251
    %312 = vmatprep.subr.mxu0 0.0
    %313 = vmatpush1.msra.mxu0 %v252
    %314 = vmatprep.subr.mxu0 0.0
    %315 = vmatpush1.msra.mxu0 %v253
    %316 = vmatprep.subr.mxu0 0.0
    %317 = vmatpush1.msra.mxu0 %v254
    %318 = vmatprep.subr.mxu0 0.0
    %319 = vmatpush1.msra.mxu0 %v255
    %320 = vmatprep.mubr.f32.mxu0 %v213
    %321 = vmatmul.mubr.f32.gmra.mrb[0].mxu0 %v212
    %v322 = vpop.f32.mrb[0].mxu0
    %v323 = vadd.f32 0.0, %v322
    %v324 = vpop.f32.mrb[0].mxu0
    %325 = vmatprep.mubr.f32.mxu0 %v215
    %326 = vmatmul.mubr.f32.gmra.mrb[0].mxu0 %v214
    %v327 = vpop.f32.mrb[0].mxu0
    %v328 = vadd.f32 0.0, %v327
    %v329 = vpop.f32.mrb[0].mxu0
    %330 = vmatprep.mubr.f32.mxu0 %v217
    %331 = vmatmul.mubr.f32.gmra.mrb[0].mxu0 %v216
    %v332 = vpop.f32.mrb[0].mxu0
    %v333 = vadd.f32 0.0, %v332
    %v334 = vpop.f32.mrb[0].mxu0
    %335 = vmatprep.mubr.f32.mxu0 %v219
    %336 = vmatmul.mubr.f32.gmra.mrb[0].mxu0 %v218
    %v337 = vpop.f32.mrb[0].mxu0
    %v338 = vadd.f32 0.0, %v337
    %v339 = vpop.f32.mrb[0].mxu0
    %340 = vdwg.mxu0
    %v341 = vadd.f32 %v220, %v323
    %v342 = vadd.f32 %v221, %v328
    %v343 = vadd.f32 %v222, %v333
    %v344 = vadd.f32 %v223, %v338
    %345 = vst.msk [vmem:[#allocation2] sm:$0xff] %vm62, %v341
    %346 = vst.msk [vmem:[#allocation2 + $0x8] sm:$0xff] %vm62, %v342
    %347 = vst.msk [vmem:[#allocation2 + $0x10] sm:$0xff] %vm62, %v343
    %348 = vst.msk [vmem:[#allocation2 + $0x18] sm:$0xff] %vm62, %v344
    // Predicated region
    $region26: #{feed_forward_module.1} parent=1 // pred_check
      %p349 = pneg %p21
    $region27: #{feed_forward_module.1} parent=1 // pred_check_branch
      %351 = sbr.rel (%p349) target = $region29
    $region28: #{feed_forward_module.1} parent=1 // pred_region
      %v352 = vld [vmem:[#allocation2] sm:$0xff]
      %v353 = vld [vmem:[#allocation2 + $0x8] sm:$0xff]
      %v354 = vld [vmem:[#allocation2 + $0x10] sm:$0xff]
      %v355 = vld [vmem:[#allocation2 + $0x18] sm:$0xff]
      %v356 = vld [vmem:[%s4] sm:$0x1]
      %v358 = vlaneseq
      %v359 = vshrl.u32 %v358, 7
      %v360 = vsub.s32 0, %v359
      %v361 = vrot.slane %v356, %v360
      %v363 = vadd.f32 %v352, %v361
      %v364 = vadd.f32 %v353, %v361
      %v365 = vadd.f32 %v354, %v361
      %v366 = vadd.f32 %v355, %v361
      %367 = vst.msk [vmem:[#allocation3] sm:$0xff] %vm62, %v363
      %368 = vst.msk [vmem:[#allocation3 + $0x8] sm:$0xff] %vm62, %v364
      %369 = vst.msk [vmem:[#allocation3 + $0x10] sm:$0xff] %vm62, %v365
      %370 = vst.msk [vmem:[#allocation3 + $0x18] sm:$0xff] %vm62, %v366
    $region29: #{feed_forward_module.1} parent=1 // pred_fallthru
      _
    // Predicated region
    $region30: #{feed_forward_module.1} parent=1 // pred_check
      _
    $region31: #{feed_forward_module.1} parent=1 // pred_check_branch
      %372 = sbr.rel (0) target = $region33
    $region32: #{feed_forward_module.1} parent=1 // pred_region
      %s374 = ssub.s32 512, 512
      %375 = vsyncadd [#allocation4], %s374
      %s376 = sshll.u32 [#allocation3], 4
      %s377 = int_to_ptr.vmem [resolvable:$true] %s376
      %382 = dma.vmem_to_hbm [thread:$0]  %s377, 512, %s5, [#allocation4], 128, 128, 8
    $region33: #{feed_forward_module.1} parent=1 // pred_fallthru
      _
    // Predicated region
    $region34: #{feed_forward_module.1} parent=1 // pred_check
      _
    $region35: #{feed_forward_module.1} parent=1 // pred_check_branch
      %384 = sbr.rel (0) target = $region37
    $region36: #{feed_forward_module.1} parent=1 // pred_region
      %385 = dma.done [#allocation4], 512
    $region37: #{feed_forward_module.1} parent=1 // pred_fallthru
      _
    %386 = vsyncpa [#allocation4], 1

</llo_original>
